<compile_context>
chip_gen: v6e
topology: v6e:2x2x1
jax: 0.10.0
libtpu: 0.0.40
codegen_flags: <defaults>
</compile_context>

<pallas_src>
import jax
import jax.numpy as jnp
from jax.experimental import pallas as pl
from jax.experimental.pallas import tpu as pltpu


def _round_up(a, b):
    return (a + b - 1) // b * b


def _patch_embed_kernel(p_ref, w_ref, pos_ref, o_ref):
    # p_ref:   (G*R_pad, K_pad)  bf16 patch rows (row 0 of each batch = zeros -> CLS)
    # w_ref:   (K_pad, tn)       bf16 flattened conv weight column tile
    # pos_ref: (R_pad, tn)       bf16 additive table (cls+pos / pos+bias), per batch
    # o_ref:   (G*R_pad, tn)     f32 (or bf16) output tile
    acc = jnp.dot(p_ref[...], w_ref[...],
                  preferred_element_type=jnp.float32)          # MXU, f32 acc
    rows, tn = acc.shape
    r_pad = pos_ref.shape[0]
    g = rows // r_pad
    pos = pos_ref[...].astype(jnp.float32)                     # upcast in VMEM
    if g == 1:
        o_ref[...] = (acc + pos).astype(o_ref.dtype)
    else:
        acc = acc.reshape(g, r_pad, tn) + pos[None]            # broadcast over G
        o_ref[...] = acc.reshape(rows, tn).astype(o_ref.dtype)


def _pick_group(B, R_pad, K_pad, hidden, out_bytes,
                row_cap=1024, vmem_budget=10 * 1024 * 1024):
    """Largest divisor G of B whose double-buffered tiles fit the VMEM budget."""
    best = 1
    for g in range(1, B + 1):
        if B % g:
            continue
        rows = g * R_pad
        if rows > row_cap:
            continue
        vmem = (2 * rows * K_pad * 2        # patch tile, bf16, double-buffered
                + 2 * rows * hidden * out_bytes   # out tile, double-buffered
                + 2 * K_pad * hidden * 2          # weight, bf16, double-buffered
                + 2 * R_pad * hidden * 2)         # pos table, bf16
        if vmem <= vmem_budget:
            best = g
    return best


def vit_embeddings(x, conv_w, conv_b, cls_token, pos_embed, patch_size,
                   out_dtype=jnp.float32):
    """ViT embeddings forward (eval mode).

    x:         (B, C, H, W) float32 (NCHW, as in PyTorch)
    conv_w:    (hidden, C, P, P)
    conv_b:    (hidden,)
    cls_token: (1, 1, hidden)
    pos_embed: (1, N+1, hidden)
    returns    (B, N+1, hidden) in out_dtype (f32 default, matching the module;
               pass bf16 if the downstream encoder runs in bf16)
    """
    B, C, H, W = x.shape
    P = patch_size
    nH, nW = H // P, W // P
    N = nH * nW
    hidden = conv_w.shape[0]
    K = C * P * P

    R = N + 1                                    # body rows incl. folded CLS
    R_pad = _round_up(R, 16)                     # bf16 sublane-pack aligned
    K_pad = _round_up(K, 128)                    # full MXU lanes on contraction

    # --- glue: bf16 cast FIRST, then patch extraction + CLS/tail/K padding ---
    # TODO(synk): with NCHW input this transpose is an extra HBM pass; an NHWC
    # input path would remove it entirely.
    x_bf = x.astype(jnp.bfloat16)
    patches = x_bf.reshape(B, C, nH, P, nW, P)
    patches = patches.transpose(0, 2, 4, 1, 3, 5).reshape(B, N, K)
    patches = jnp.pad(patches, ((0, 0),
                                (1, R_pad - R),      # prepend zero CLS row, pad tail
                                (0, K_pad - K)))     # pad contraction lanes
    patches_flat = patches.reshape(B * R_pad, K_pad)

    # Flattened conv weight (K_pad, hidden), bf16.
    w_mat = conv_w.reshape(hidden, K).T.astype(jnp.bfloat16)
    if K_pad != K:
        w_mat = jnp.pad(w_mat, ((0, K_pad - K), (0, 0)))

    # Additive table: row 0 = cls + pos[0] (no bias); rows 1..N = pos[1:] + bias.
    pos_table = jnp.concatenate(
        [cls_token.reshape(1, hidden) + pos_embed[0, :1],
         pos_embed[0, 1:] + conv_b[None, :]], axis=0)            # (R, hidden) f32
    pos_table = jnp.pad(pos_table, ((0, R_pad - R), (0, 0))).astype(jnp.bfloat16)

    # --- tiling plan ---
    out_bytes = jnp.dtype(out_dtype).itemsize
    G = _pick_group(B, R_pad, K_pad, hidden, out_bytes)
    m_tiles = B // G
    col_tiles = 1
    if m_tiles < 2:                               # keep both v7x TCs busy
        for c in (2, 3, 4):
            if hidden % (c * 128) == 0:
                col_tiles = c
                break
    tn = hidden // col_tiles
    tm = G * R_pad

    cost = pl.CostEstimate(
        flops=2 * (B * R_pad) * K_pad * hidden,
        transcendentals=0,
        bytes_accessed=(B * R_pad * K_pad * 2 + K_pad * hidden * 2
                        + R_pad * hidden * 2 + B * R_pad * hidden * out_bytes))

    out_flat = pl.pallas_call(
        _patch_embed_kernel,
        out_shape=jax.ShapeDtypeStruct((B * R_pad, hidden), out_dtype),
        grid_spec=pltpu.PrefetchScalarGridSpec(
            num_scalar_prefetch=0,
            grid=(m_tiles, col_tiles),
            in_specs=[
                pl.BlockSpec((tm, K_pad), lambda i, j: (i, 0)),
                pl.BlockSpec((K_pad, tn), lambda i, j: (0, j)),
                pl.BlockSpec((R_pad, tn), lambda i, j: (0, j)),
            ],
            out_specs=pl.BlockSpec((tm, tn), lambda i, j: (i, j)),
        ),
        compiler_params=pltpu.CompilerParams(
            dimension_semantics=("parallel", "parallel"),
            vmem_limit_bytes=32 * 1024 * 1024),
        cost_estimate=cost,
    )(patches_flat, w_mat, pos_table)

    out = out_flat.reshape(B, R_pad, hidden)
    if R_pad != R:
        out = out[:, :R, :]                        # slice off tail padding only
    return out
    # TODO(synk): dropout is identity in eval mode, intentionally omitted.


if __name__ == "__main__":
    # Small, ViT-consistent shapes: image 32x32, patch 8 -> 16 patches, hidden 256
    # (exercises CLS folding, row/K padding, batch grouping and column tiling).
    B, C, IMG, P, HIDDEN = 2, 3, 32, 8, 256
    N = (IMG // P) * (IMG // P)

    key = jax.random.PRNGKey(0)
    kx, kw, kb, kc, kp = jax.random.split(key, 5)

    x = jax.random.normal(kx, (B, C, IMG, IMG), dtype=jnp.float32)
    conv_w = jax.random.normal(kw, (HIDDEN, C, P, P), dtype=jnp.float32) * 0.02
    conv_b = jax.random.normal(kb, (HIDDEN,), dtype=jnp.float32) * 0.02
    cls_token = jax.random.normal(kc, (1, 1, HIDDEN), dtype=jnp.float32) * 0.02
    pos_embed = jax.random.normal(kp, (1, N + 1, HIDDEN), dtype=jnp.float32) * 0.02

    out = vit_embeddings(x, conv_w, conv_b, cls_token, pos_embed, P)
    out = jax.block_until_ready(out)

    # Pure-JAX f32 reference of the same math.
    patches = x.reshape(B, C, IMG // P, P, IMG // P, P)
    patches = patches.transpose(0, 2, 4, 1, 3, 5).reshape(B, N, C * P * P)
    ref = patches @ conv_w.reshape(HIDDEN, -1).T + conv_b
    ref = jnp.concatenate([jnp.broadcast_to(cls_token, (B, 1, HIDDEN)), ref], axis=1)
    ref = ref + pos_embed

    assert out.shape == (B, N + 1, HIDDEN)
    # bf16 MXU inputs / bf16 pos table with f32 accumulation -> loose tolerance.
    assert jnp.allclose(out, ref, atol=2e-2, rtol=2e-2), float(
        jnp.max(jnp.abs(out - ref)))

    print("KERNEL_OK")
</pallas_src>

<mosaic_0001>
module attributes {stable_mosaic.version = 11 : i64} {
  func.func @_patch_embed_kernel(%arg0: i32, %arg1: i32, %arg2: memref<64x256xbf16, #tpu.memory_space<vmem>>, %arg3: memref<256x128xbf16, #tpu.memory_space<vmem>>, %arg4: memref<32x128xbf16, #tpu.memory_space<vmem>>, %arg5: memref<64x128xf32, #tpu.memory_space<vmem>>) attributes {dimension_semantics = [#tpu.dimension_semantics<parallel>, #tpu.dimension_semantics<parallel>], iteration_bounds = array<i64: 1, 2>, scalar_prefetch = 0 : i64, scratch_operands = 0 : i64, tpu.core_type = #tpu.core_type<tc>, window_params = [{transform_indices = @transform_0, window_bounds = array<i64: 64, 256>}, {transform_indices = @transform_1, window_bounds = array<i64: 256, 128>}, {transform_indices = @transform_2, window_bounds = array<i64: 32, 128>}, {transform_indices = @transform_3, window_bounds = array<i64: 64, 128>}]} {
    %c0 = arith.constant 0 : index
    %c0_0 = arith.constant 0 : index
    %0 = vector.load %arg2[%c0, %c0_0] : memref<64x256xbf16, #tpu.memory_space<vmem>>, vector<64x256xbf16>
    %c0_1 = arith.constant 0 : index
    %c0_2 = arith.constant 0 : index
    %1 = vector.load %arg3[%c0_1, %c0_2] : memref<256x128xbf16, #tpu.memory_space<vmem>>, vector<256x128xbf16>
    %cst = arith.constant dense<0.000000e+00> : vector<64x128xf32>
    %2 = tpu.matmul %0, %1, %cst {dimension_numbers = #tpu.dot_dimension_numbers<[1], [0], [0], [1], [0, 0, 1, 1], [], []>} : vector<64x256xbf16>, vector<256x128xbf16>, vector<64x128xf32> -> vector<64x128xf32>
    %c0_3 = arith.constant 0 : index
    %c0_4 = arith.constant 0 : index
    %3 = vector.load %arg4[%c0_3, %c0_4] : memref<32x128xbf16, #tpu.memory_space<vmem>>, vector<32x128xbf16>
    %4 = arith.extf %3 : vector<32x128xbf16> to vector<32x128xf32>
    %5 = vector.shape_cast %2 : vector<64x128xf32> to vector<2x32x128xf32>
    %6 = vector.shape_cast %4 : vector<32x128xf32> to vector<1x32x128xf32>
    %7 = vector.broadcast %6 : vector<1x32x128xf32> to vector<2x32x128xf32>
    %8 = arith.addf %5, %7 : vector<2x32x128xf32>
    %9 = vector.shape_cast %8 : vector<2x32x128xf32> to vector<64x128xf32>
    %c0_5 = arith.constant 0 : index
    %c0_6 = arith.constant 0 : index
    %10 = vector.load %arg5[%c0_5, %c0_6] : memref<64x128xf32, #tpu.memory_space<vmem>>, vector<64x128xf32>
    tpu.vector_store %arg5[%c0_5, %c0_6], %9 {strides = array<i32>} : memref<64x128xf32, #tpu.memory_space<vmem>>, vector<64x128xf32>,
    return
  }
  func.func @transform_0(%arg0: i32, %arg1: i32) -> (i32, i32) {
    %c0_i32 = arith.constant 0 : i32
    %c0_i32_0 = arith.constant 0 : i32
    return %arg0, %c0_i32 : i32, i32
  }
  func.func @transform_1(%arg0: i32, %arg1: i32) -> (i32, i32) {
    %c0_i32 = arith.constant 0 : i32
    %c0_i32_0 = arith.constant 0 : i32
    return %c0_i32, %arg1 : i32, i32
  }
  func.func @transform_2(%arg0: i32, %arg1: i32) -> (i32, i32) {
    %c0_i32 = arith.constant 0 : i32
    %c0_i32_0 = arith.constant 0 : i32
    return %c0_i32, %arg1 : i32, i32
  }
  func.func @transform_3(%arg0: i32, %arg1: i32) -> (i32, i32) {
    %c0_i32 = arith.constant 0 : i32
    return %arg0, %arg1 : i32, i32
  }
}

</mosaic_0001>

<llo_original>
// kernel: tpu_custom_call.1
$region0: #{tpu_custom_call.1}
  #allocation0 [shape = 'u32[]', space=smem, size = 0x4, offset = 0x4, fixed_abs, tag = 'smem constant byte address 0x4 - core index']
  #allocation1 [shape = 'u32[144,128]{1,0:T(1,128)}', space=vmem, size = 0x12000, scoped, tag = 'internal scratch']
  %s0 = inlined_call_operand.hbm [shape: bf16[64,256], index: 0, kind: input, shape index: {}]
  %s1 = inlined_call_operand.hbm [shape: bf16[256,256], index: 1, kind: input, shape index: {}]
  %s2 = inlined_call_operand.hbm [shape: bf16[32,256], index: 2, kind: input, shape index: {}]
  %s3 = inlined_call_operand.hbm [shape: f32[64,256], index: 3, kind: output, shape index: {}]
  %s4 = sld [smem:[#allocation0]]
  $region57: #{tpu_custom_call.1} parent=0
    _
  %s6 = ssub.s32 1, %s4
  %s7 = scalar_select 0, %s6, %s4
  $region1: #{tpu_custom_call.1} parent=0
    #allocation2 [shape = 'u8[32768]{0}', space=vmem, size = 0x8000, scoped, tag = 'input window, operand 0, single buffered']
    #allocation3 [shape = 's32[2]{0}', space=sflag, size = 0x8, scoped, tag = 'scoped memory for tpu_custom_call.1']
    #allocation4 [shape = 's32[2]{0}', space=sflag, size = 0x8, scoped, tag = 'scoped memory for tpu_custom_call.1']
    #allocation5 [shape = 'u8[131072]{0}', space=vmem, size = 0x20000, scoped, tag = 'input window, operand 1']
    #allocation6 [shape = 's32[2]{0}', space=sflag, size = 0x8, scoped, tag = 'scoped memory for tpu_custom_call.1']
    #allocation7 [shape = 'u8[16384]{0}', space=vmem, size = 0x4000, scoped, tag = 'input window, operand 2']
    #allocation8 [shape = 'u8[65536]{0}', space=vmem, size = 0x10000, scoped, tag = 'output window, operand 0']
    %8 = vsyncpa [#allocation3], 0
    %9 = vsyncpa [#allocation6], 0
    %s10 = scalar_lea.sflag [#allocation6], 1
    %11 = vsyncpa %s10, 0
    %12 = vsyncpa [#allocation4], 0
    %s13 = scalar_lea.sflag [#allocation4], 1
    %14 = vsyncpa %s13, 0
    loop: start=0, step=1, limit=4
    $region2: #{tpu_custom_call.1} parent=1 // loop_pre_header
      _
    $region3: #{tpu_custom_call.1} parent=1 // loop_header
      %s16 = sphi 0, %s20
      %p17 = scmp.ge.s32.totalorder %s16, 4
      %s23 = sphi 0, %s35
      %s24 = sphi 0, %s31
      %s25 = sphi 0, %s23
      %s26 = sphi 0, %s24
      %s27 = sphi 0, %s25
      %s28 = sphi 0, %s26
      %s38 = sphi 0, %s40
      %s41 = sphi 0, %s38
      %s42 = sphi 0, %s41
      %s58 = sphi 0, %s42
      %s64 = sphi 0, %s66
      %s67 = sphi 0, %s64
      %s68 = sphi 0, %s67
      %s84 = sphi 0, %s68
      %s90 = sphi 0, %s92
      %s93 = sphi 0, %s90
      %s94 = sphi 0, %s93
      %s110 = sphi 0, %s94
      %s118 = sphi 0, %s120
      %s121 = sphi 0, %s118
      %s122 = sphi 0, %s121
      %s138 = sphi 0, %s122
    $region4: #{tpu_custom_call.1} parent=1 // loop_header_branch
      %19 = sbr.rel (%p17) target = $region8
    $region5: #{tpu_custom_call.1} parent=1 // loop_body
      %s21 = ssub.s32 %s16, 1
      %s22 = ssub.s32 %s16, 2
      %s29 = sadd.s32 1, %s24
      %p30 = scmp.ge.s32.totalorder %s29, 2
      %s31 = scalar_select %p30, 0, %s29
      %s32 = sadd.s32 1, %s23
      %s33 = scalar_select %p30, %s32, %s23
      %p34 = scmp.ge.s32.totalorder %s33, 1
      %s35 = scalar_select %p34, 0, %s33
      %s36 = ssub.s32 %s23, %s35
      %p37 = scmp.eq.s32.totalorder %s36, 0
      %s39 = sadd.s32 %s38, 1
      %s40 = scalar_select %p37, %s38, %s39
      %p43 = pneg %p37
      %p44 = scmp.eq.s32.totalorder %s16, 1
      %p45 = por %p43, %p44
      %p46 = scmp.ne.s32.totalorder %s38, %s41
      %p47 = scmp.eq.s32.totalorder %s16, 0
      %p48 = por %p46, %p47
      %p49 = scmp.ne.s32.totalorder %s38, %s41
      %p50 = scmp.eq.s32.totalorder %s21, 1
      %p51 = por %p49, %p50
      %p52 = scmp.ne.s32.totalorder %s41, %s42
      %p53 = scmp.eq.s32.totalorder %s21, 0
      %p54 = por %p52, %p53
      %p55 = scmp.ne.s32.totalorder %s41, %s42
      %p56 = scmp.eq.s32.totalorder %s22, 1
      %p57 = por %p55, %p56
      %p59 = scmp.ne.s32.totalorder %s42, %s58
      %p60 = scmp.eq.s32.totalorder %s22, 0
      %p61 = por %p59, %p60
      %s62 = ssub.s32 %s24, %s31
      %p63 = scmp.eq.s32.totalorder %s62, 0
      %s65 = sadd.s32 %s64, 1
      %s66 = scalar_select %p63, %s64, %s65
      %p69 = pneg %p63
      %p70 = scmp.eq.s32.totalorder %s16, 1
      %p71 = por %p69, %p70
      %p72 = scmp.ne.s32.totalorder %s64, %s67
      %p73 = scmp.eq.s32.totalorder %s16, 0
      %p74 = por %p72, %p73
      %p75 = scmp.ne.s32.totalorder %s64, %s67
      %p76 = scmp.eq.s32.totalorder %s21, 1
      %p77 = por %p75, %p76
      %p78 = scmp.ne.s32.totalorder %s67, %s68
      %p79 = scmp.eq.s32.totalorder %s21, 0
      %p80 = por %p78, %p79
      %p81 = scmp.ne.s32.totalorder %s67, %s68
      %p82 = scmp.eq.s32.totalorder %s22, 1
      %p83 = por %p81, %p82
      %p85 = scmp.ne.s32.totalorder %s68, %s84
      %p86 = scmp.eq.s32.totalorder %s22, 0
      %p87 = por %p85, %p86
      %s88 = ssub.s32 %s24, %s31
      %p89 = scmp.eq.s32.totalorder %s88, 0
      %s91 = sadd.s32 %s90, 1
      %s92 = scalar_select %p89, %s90, %s91
      %p95 = pneg %p89
      %p96 = scmp.eq.s32.totalorder %s16, 1
      %p97 = por %p95, %p96
      %p98 = scmp.ne.s32.totalorder %s90, %s93
      %p99 = scmp.eq.s32.totalorder %s16, 0
      %p100 = por %p98, %p99
      %p101 = scmp.ne.s32.totalorder %s90, %s93
      %p102 = scmp.eq.s32.totalorder %s21, 1
      %p103 = por %p101, %p102
      %p104 = scmp.ne.s32.totalorder %s93, %s94
      %p105 = scmp.eq.s32.totalorder %s21, 0
      %p106 = por %p104, %p105
      %p107 = scmp.ne.s32.totalorder %s93, %s94
      %p108 = scmp.eq.s32.totalorder %s22, 1
      %p109 = por %p107, %p108
      %p111 = scmp.ne.s32.totalorder %s94, %s110
      %p112 = scmp.eq.s32.totalorder %s22, 0
      %p113 = por %p111, %p112
      %s114 = ssub.s32 %s23, %s35
      %s115 = ssub.s32 %s24, %s31
      %s116 = sor.u32 %s114, %s115
      %p117 = scmp.eq.s32.totalorder %s116, 0
      %s119 = sadd.s32 %s118, 1
      %s120 = scalar_select %p117, %s118, %s119
      %p123 = pneg %p117
      %p124 = scmp.eq.s32.totalorder %s16, 1
      %p125 = por %p123, %p124
      %p126 = scmp.ne.s32.totalorder %s118, %s121
      %p127 = scmp.eq.s32.totalorder %s16, 0
      %p128 = por %p126, %p127
      %p129 = scmp.ne.s32.totalorder %s118, %s121
      %p130 = scmp.eq.s32.totalorder %s21, 1
      %p131 = por %p129, %p130
      %p132 = scmp.ne.s32.totalorder %s121, %s122
      %p133 = scmp.eq.s32.totalorder %s21, 0
      %p134 = por %p132, %p133
      %p135 = scmp.ne.s32.totalorder %s121, %s122
      %p136 = scmp.eq.s32.totalorder %s22, 1
      %p137 = por %p135, %p136
      %p139 = scmp.ne.s32.totalorder %s122, %s138
      %p140 = scmp.eq.s32.totalorder %s22, 0
      %p141 = por %p139, %p140
      %p142 = scmp.le.s32.totalorder 1, %s16
      %p143 = scmp.lt.s32.totalorder %s16, 3
      %p144 = pnand %p142, %p143
      %p145 = pneg %p144
      // Predicated region
      $region9: #{tpu_custom_call.1} parent=5 // pred_check
        _
      $region10: #{tpu_custom_call.1} parent=5 // pred_check_branch
        %147 = sbr.rel (%p144) target = $region12
      $region11: #{tpu_custom_call.1} parent=5 // pred_region
        %s148 = ssub.s32 %s16, 1
        // Predicated region
        $region13: #{tpu_custom_call.1} parent=11 // pred_check
          %p149 = pneg %p54
        $region14: #{tpu_custom_call.1} parent=11 // pred_check_branch
          %151 = sbr.rel (%p149) target = $region16
        $region15: #{tpu_custom_call.1} parent=11 // pred_region
          %s152 = smul.u32 8, %s25
          %s154 = ssub.s32 1024, 1024
          %155 = vsyncadd [#allocation3], %s154
          %s156 = smul.addr %s152, 2
          %s157 = smul.addr %s156, 64
          %s158 = scalar_lea.hbm %s0, %s157
          %s159 = sshll.u32 [#allocation2], 4
          %s160 = int_to_ptr.vmem [resolvable:$true] %s159
          %165 = dma.hbm_to_vmem [thread:$0]  %s158, 1024, %s160, [#allocation3], 128, 128, 8
        $region16: #{tpu_custom_call.1} parent=11 // pred_fallthru
          _
      $region12: #{tpu_custom_call.1} parent=5 // pred_fallthru
        _
      %p166 = scmp.lt.s32.totalorder %s16, 2
      // Predicated region
      $region17: #{tpu_custom_call.1} parent=5 // pred_check
        %p167 = pneg %p166
      $region18: #{tpu_custom_call.1} parent=5 // pred_check_branch
        %169 = sbr.rel (%p167) target = $region20
      $region19: #{tpu_custom_call.1} parent=5 // pred_region
        // Predicated region
        $region21: #{tpu_custom_call.1} parent=19 // pred_check
          %p170 = pneg %p74
        $region22: #{tpu_custom_call.1} parent=19 // pred_check_branch
          %172 = sbr.rel (%p170) target = $region24
        $region23: #{tpu_custom_call.1} parent=19 // pred_region
          %s173 = sand.u32 %s16, 1
          %s174 = scalar_lea.sflag [#allocation6], %s173
          %s175 = sand.u32 %s64, 1
          %s176 = smul.addr %s175, 128
          %s177 = scalar_lea.vmem [#allocation5], %s176
          %s179 = ssub.s32 2048, 2048
          %180 = vsyncadd %s174, %s179
          %s181 = smul.addr %s24, 64
          %s182 = scalar_lea.hbm %s1, %s181
          %s183 = sshll.u32 %s177, 4
          %s184 = int_to_ptr.vmem [resolvable:$true] %s183
          %189 = dma.hbm_to_vmem [thread:$0]  %s182, 2048, %s184, %s174, 128, 64, 4
        $region24: #{tpu_custom_call.1} parent=19 // pred_fallthru
          _
        // Predicated region
        $region25: #{tpu_custom_call.1} parent=19 // pred_check
          %p190 = pneg %p100
        $region26: #{tpu_custom_call.1} parent=19 // pred_check_branch
          %192 = sbr.rel (%p190) target = $region28
        $region27: #{tpu_custom_call.1} parent=19 // pred_region
          %s193 = sand.u32 %s16, 1
          %s194 = scalar_lea.sflag [#allocation6], %s193
          %s195 = sand.u32 %s90, 1
          %s196 = smul.addr %s195, 16
          %s197 = scalar_lea.vmem [#allocation7], %s196
          %s199 = ssub.s32 256, 256
          %200 = vsyncadd %s194, %s199
          %s201 = smul.addr %s24, 64
          %s202 = scalar_lea.hbm %s2, %s201
          %s203 = sshll.u32 %s197, 4
          %s204 = int_to_ptr.vmem [resolvable:$true] %s203
          %209 = dma.hbm_to_vmem [thread:$0]  %s202, 256, %s204, %s194, 128, 64, 4
        $region28: #{tpu_custom_call.1} parent=19 // pred_fallthru
          _
      $region20: #{tpu_custom_call.1} parent=5 // pred_fallthru
        _
      %p210 = scmp.le.s32.totalorder 1, %s16
      %p211 = scmp.lt.s32.totalorder %s16, 3
      %p212 = pnand %p210, %p211
      %p213 = pneg %p212
      // Predicated region
      $region29: #{tpu_custom_call.1} parent=5 // pred_check
        _
      $region30: #{tpu_custom_call.1} parent=5 // pred_check_branch
        %215 = sbr.rel (%p212) target = $region32
      $region31: #{tpu_custom_call.1} parent=5 // pred_region
        %s216 = ssub.s32 %s16, 1
        // Predicated region
        $region33: #{tpu_custom_call.1} parent=31 // pred_check
          %p217 = pneg %p54
        $region34: #{tpu_custom_call.1} parent=31 // pred_check_branch
          %219 = sbr.rel (%p217) target = $region36
        $region35: #{tpu_custom_call.1} parent=31 // pred_region
          %220 = dma.done [#allocation3], 1024
        $region36: #{tpu_custom_call.1} parent=31 // pred_fallthru
          _
        %s221 = sand.u32 %s21, 1
        %s222 = scalar_lea.sflag [#allocation6], %s221
        %s223 = sand.u32 %s67, 1
        %s224 = smul.addr %s223, 128
        %s225 = scalar_lea.vmem [#allocation5], %s224
        // Predicated region
        $region37: #{tpu_custom_call.1} parent=31 // pred_check
          %p226 = pneg %p80
        $region38: #{tpu_custom_call.1} parent=31 // pred_check_branch
          %228 = sbr.rel (%p226) target = $region40
        $region39: #{tpu_custom_call.1} parent=31 // pred_region
          %229 = dma.done %s222, 2048
        $region40: #{tpu_custom_call.1} parent=31 // pred_fallthru
          _
        %s230 = sand.u32 %s21, 1
        %s231 = scalar_lea.sflag [#allocation6], %s230
        %s232 = sand.u32 %s93, 1
        %s233 = smul.addr %s232, 16
        %s234 = scalar_lea.vmem [#allocation7], %s233
        // Predicated region
        $region41: #{tpu_custom_call.1} parent=31 // pred_check
          %p235 = pneg %p106
        $region42: #{tpu_custom_call.1} parent=31 // pred_check_branch
          %237 = sbr.rel (%p235) target = $region44
        $region43: #{tpu_custom_call.1} parent=31 // pred_region
          %238 = dma.done %s231, 256
        $region44: #{tpu_custom_call.1} parent=31 // pred_fallthru
          _
        %p239 = pneg %p54
        %p240 = pneg %p51
        %s241 = sand.u32 %s21, 1
        %s242 = scalar_lea.sflag [#allocation6], %s241
        %s243 = sand.u32 %s67, 1
        %s244 = smul.addr %s243, 128
        %s245 = scalar_lea.vmem [#allocation5], %s244
        %p246 = pneg %p80
        %p247 = pneg %p77
        %s248 = sand.u32 %s21, 1
        %s249 = scalar_lea.sflag [#allocation6], %s248
        %s250 = sand.u32 %s93, 1
        %s251 = smul.addr %s250, 16
        %s252 = scalar_lea.vmem [#allocation7], %s251
        %p253 = pneg %p106
        %p254 = pneg %p103
        %p255 = pneg %p134
        %p256 = pneg %p131
        %s257 = sand.u32 %s121, 1
        %s258 = scalar_lea.sflag [#allocation4], %s257
        %s259 = sand.u32 %s121, 1
        %s260 = smul.addr %s259, 64
        %s261 = scalar_lea.vmem [#allocation8], %s260
        %s262 = smul.u32 8, %s25
        %s263 = smul.u32 8, %s25
        %v265 = vld [vmem:[#allocation2] sm:$0xff]
        %v266 = vld [vmem:[#allocation2 + $0x8] sm:$0xff]
        %v267 = vld [vmem:[#allocation2 + $0x10] sm:$0xff]
        %v268 = vld [vmem:[#allocation2 + $0x18] sm:$0xff]
        %v269 = vld [vmem:[#allocation2 + $0x20] sm:$0xff]
        %v270 = vld [vmem:[#allocation2 + $0x28] sm:$0xff]
        %v271 = vld [vmem:[#allocation2 + $0x30] sm:$0xff]
        %v272 = vld [vmem:[#allocation2 + $0x38] sm:$0xff]
        %v273 = vld [vmem:[%s225] sm:$0xf]
        %v274 = vld [vmem:[%s225 + $0x4] sm:$0xf]
        %v275 = vld [vmem:[%s225 + $0x8] sm:$0xf]
        %v276 = vld [vmem:[%s225 + $0xc] sm:$0xf]
        %v277 = vld [vmem:[%s225 + $0x10] sm:$0xf]
        %v278 = vld [vmem:[%s225 + $0x14] sm:$0xf]
        %v279 = vld [vmem:[%s225 + $0x18] sm:$0xf]
        %v280 = vld [vmem:[%s225 + $0x1c] sm:$0xf]
        %v281 = vld [vmem:[%s225 + $0x20] sm:$0xf]
        %v282 = vld [vmem:[%s225 + $0x24] sm:$0xf]
        %v283 = vld [vmem:[%s225 + $0x28] sm:$0xf]
        %v284 = vld [vmem:[%s225 + $0x2c] sm:$0xf]
        %v285 = vld [vmem:[%s225 + $0x30] sm:$0xf]
        %v286 = vld [vmem:[%s225 + $0x34] sm:$0xf]
        %v287 = vld [vmem:[%s225 + $0x38] sm:$0xf]
        %v288 = vld [vmem:[%s225 + $0x3c] sm:$0xf]
        %v289 = vld [vmem:[%s225 + $0x40] sm:$0xf]
        %v290 = vld [vmem:[%s225 + $0x44] sm:$0xf]
        %v291 = vld [vmem:[%s225 + $0x48] sm:$0xf]
        %v292 = vld [vmem:[%s225 + $0x4c] sm:$0xf]
        %v293 = vld [vmem:[%s225 + $0x50] sm:$0xf]
        %v294 = vld [vmem:[%s225 + $0x54] sm:$0xf]
        %v295 = vld [vmem:[%s225 + $0x58] sm:$0xf]
        %v296 = vld [vmem:[%s225 + $0x5c] sm:$0xf]
        %v297 = vld [vmem:[%s225 + $0x60] sm:$0xf]
        %v298 = vld [vmem:[%s225 + $0x64] sm:$0xf]
        %v299 = vld [vmem:[%s225 + $0x68] sm:$0xf]
        %v300 = vld [vmem:[%s225 + $0x6c] sm:$0xf]
        %v301 = vld [vmem:[%s225 + $0x70] sm:$0xf]
        %v302 = vld [vmem:[%s225 + $0x74] sm:$0xf]
        %v303 = vld [vmem:[%s225 + $0x78] sm:$0xf]
        %v304 = vld [vmem:[%s225 + $0x7c] sm:$0xf]
        %v313 = vunpack.c.l.b16 %v265
        %v314 = vunpack.c.h.b16 %v265
        %v315 = vunpack.c.l.b16 %v266
        %v316 = vunpack.c.h.b16 %v266
        %v317 = vunpack.c.l.b16 %v267
        %v318 = vunpack.c.h.b16 %v267
        %v319 = vunpack.c.l.b16 %v268
        %v320 = vunpack.c.h.b16 %v268
        %v321 = vunpack.c.l.b16 %v269
        %v322 = vunpack.c.h.b16 %v269
        %v323 = vunpack.c.l.b16 %v270
        %v324 = vunpack.c.h.b16 %v270
        %v325 = vunpack.c.l.b16 %v271
        %v326 = vunpack.c.h.b16 %v271
        %v327 = vunpack.c.l.b16 %v272
        %v328 = vunpack.c.h.b16 %v272
        %v329 = vpack.c.b16 %v315, %v313
        %v330 = vpack.c.b16 %v316, %v314
        %v331 = vpack.c.b16 %v319, %v317
        %v332 = vpack.c.b16 %v320, %v318
        %v333 = vpack.c.b16 %v323, %v321
        %v334 = vpack.c.b16 %v324, %v322
        %v335 = vpack.c.b16 %v327, %v325
        %v336 = vpack.c.b16 %v328, %v326
        %v377 = vunpack.c.l.b16 %v273
        %v378 = vunpack.c.l.b16 %v274
        %v379 = vunpack.c.l.b16 %v275
        %v380 = vunpack.c.l.b16 %v276
        %v381 = vunpack.c.l.b16 %v277
        %v382 = vunpack.c.l.b16 %v278
        %v383 = vunpack.c.l.b16 %v279
        %v384 = vunpack.c.l.b16 %v280
        %v385 = vunpack.c.l.b16 %v281
        %v386 = vunpack.c.l.b16 %v282
        %v387 = vunpack.c.l.b16 %v283
        %v388 = vunpack.c.l.b16 %v284
        %v389 = vunpack.c.l.b16 %v285
        %v390 = vunpack.c.l.b16 %v286
        %v391 = vunpack.c.l.b16 %v287
        %v392 = vunpack.c.l.b16 %v288
        %v393 = vunpack.c.l.b16 %v289
        %v394 = vunpack.c.l.b16 %v290
        %v395 = vunpack.c.l.b16 %v291
        %v396 = vunpack.c.l.b16 %v292
        %v397 = vunpack.c.l.b16 %v293
        %v398 = vunpack.c.l.b16 %v294
        %v399 = vunpack.c.l.b16 %v295
        %v400 = vunpack.c.l.b16 %v296
        %v401 = vunpack.c.l.b16 %v297
        %v402 = vunpack.c.l.b16 %v298
        %v403 = vunpack.c.l.b16 %v299
        %v404 = vunpack.c.l.b16 %v300
        %v405 = vunpack.c.l.b16 %v301
        %v406 = vunpack.c.l.b16 %v302
        %v407 = vunpack.c.l.b16 %v303
        %v408 = vunpack.c.l.b16 %v304
        %v409 = vpack.c.b16 %v378, %v377
        %v410 = vpack.c.b16 %v380, %v379
        %v411 = vpack.c.b16 %v382, %v381
        %v412 = vpack.c.b16 %v384, %v383
        %v413 = vpack.c.b16 %v386, %v385
        %v414 = vpack.c.b16 %v388, %v387
        %v415 = vpack.c.b16 %v390, %v389
        %v416 = vpack.c.b16 %v392, %v391
        %v417 = vpack.c.b16 %v394, %v393
        %v418 = vpack.c.b16 %v396, %v395
        %v419 = vpack.c.b16 %v398, %v397
        %v420 = vpack.c.b16 %v400, %v399
        %v421 = vpack.c.b16 %v402, %v401
        %v422 = vpack.c.b16 %v404, %v403
        %v423 = vpack.c.b16 %v406, %v405
        %v424 = vpack.c.b16 %v408, %v407
        %441 = vmatprep.subr.bf16.mxu0 0
        %442 = vmatpush1.bf16.msra.mxu0 %v416
        %443 = vmatprep.subr.bf16.mxu0 0
        %444 = vmatpush1.bf16.msra.mxu0 %v415
        %445 = vmatprep.subr.bf16.mxu0 0
        %446 = vmatpush1.bf16.msra.mxu0 %v414
        %447 = vmatprep.subr.bf16.mxu0 0
        %448 = vmatpush1.bf16.msra.mxu0 %v413
        %449 = vmatprep.subr.bf16.mxu0 0
        %450 = vmatpush1.bf16.msra.mxu0 %v412
        %451 = vmatprep.subr.bf16.mxu0 0
        %452 = vmatpush1.bf16.msra.mxu0 %v411
        %453 = vmatprep.subr.bf16.mxu0 0
        %454 = vmatpush1.bf16.msra.mxu0 %v410
        %455 = vmatprep.subr.bf16.mxu0 0
        %456 = vmatpush1.bf16.msra.mxu0 %v409
        %457 = vmatprep.subr.bf16.mxu0 0
        %458 = vmatpush2.bf16.msra.mxu0 %v424
        %459 = vmatprep.subr.bf16.mxu0 0
        %460 = vmatpush2.bf16.msra.mxu0 %v423
        %461 = vmatprep.subr.bf16.mxu0 0
        %462 = vmatpush2.bf16.msra.mxu0 %v422
        %463 = vmatprep.subr.bf16.mxu0 0
        %464 = vmatpush2.bf16.msra.mxu0 %v421
        %465 = vmatprep.subr.bf16.mxu0 0
        %466 = vmatpush2.bf16.msra.mxu0 %v420
        %467 = vmatprep.subr.bf16.mxu0 0
        %468 = vmatpush2.bf16.msra.mxu0 %v419
        %469 = vmatprep.subr.bf16.mxu0 0
        %470 = vmatpush2.bf16.msra.mxu0 %v418
        %471 = vmatprep.subr.bf16.mxu0 0
        %472 = vmatpush2.bf16.msra.mxu0 %v417
        %473 = vmatprep.mubr.bf16.mxu0 %v330
        %474 = vmatmul.mubr.bf16.gmra.mxu0 %v329
        %v475 = vpop.f32.mrf.mxu0
        %v476 = vadd.f32 0.0, %v475
        %v477 = vpop.f32.mrf.mxu0
        %v478 = vpop.f32.mrf.mxu0
        %v479 = vadd.f32 0.0, %v478
        %v480 = vpop.f32.mrf.mxu0
        %481 = vmatprep.mubr.bf16.mxu0 %v332
        %482 = vmatmul.mubr.bf16.gmra.mxu0 %v331
        %v483 = vpop.f32.mrf.mxu0
        %v484 = vadd.f32 0.0, %v483
        %v485 = vpop.f32.mrf.mxu0
        %v486 = vpop.f32.mrf.mxu0
        %v487 = vadd.f32 0.0, %v486
        %v488 = vpop.f32.mrf.mxu0
        %489 = vmatprep.mubr.bf16.mxu0 %v334
        %490 = vmatmul.mubr.bf16.gmra.mxu0 %v333
        %v491 = vpop.f32.mrf.mxu0
        %v492 = vadd.f32 0.0, %v491
        %v493 = vpop.f32.mrf.mxu0
        %v494 = vpop.f32.mrf.mxu0
        %v495 = vadd.f32 0.0, %v494
        %v496 = vpop.f32.mrf.mxu0
        %497 = vmatprep.mubr.bf16.mxu0 %v336
        %498 = vmatmul.mubr.bf16.gmra.mxu0 %v335
        %v499 = vpop.f32.mrf.mxu0
        %v500 = vadd.f32 0.0, %v499
        %v501 = vpop.f32.mrf.mxu0
        %v502 = vpop.f32.mrf.mxu0
        %v503 = vadd.f32 0.0, %v502
        %v504 = vpop.f32.mrf.mxu0
        %505 = vdwg.mxu0
        %v506 = vld [vmem:[%s234] sm:$0xf]
        %v507 = vld [vmem:[%s234 + $0x4] sm:$0xf]
        %v508 = vld [vmem:[%s234 + $0x8] sm:$0xf]
        %v509 = vld [vmem:[%s234 + $0xc] sm:$0xf]
        %v510 = vunpack.c.l.bf16 %v506
        %v511 = vunpack.c.l.bf16 %v507
        %v512 = vunpack.c.l.bf16 %v508
        %v513 = vunpack.c.l.bf16 %v509
        %v514 = vadd.f32 %v476, %v510
        %v515 = vadd.f32 %v479, %v511
        %v516 = vadd.f32 %v484, %v512
        %v517 = vadd.f32 %v487, %v513
        %v518 = vadd.f32 %v492, %v510
        %v519 = vadd.f32 %v495, %v511
        %v520 = vadd.f32 %v500, %v512
        %v521 = vadd.f32 %v503, %v513
        %522 = vst [vmem:[%s261] sm:$0xff] %v514
        %523 = vst [vmem:[%s261 + $0x8] sm:$0xff] %v515
        %524 = vst [vmem:[%s261 + $0x10] sm:$0xff] %v516
        %525 = vst [vmem:[%s261 + $0x18] sm:$0xff] %v517
        %526 = vst [vmem:[%s261 + $0x20] sm:$0xff] %v518
        %527 = vst [vmem:[%s261 + $0x28] sm:$0xff] %v519
        %528 = vst [vmem:[%s261 + $0x30] sm:$0xff] %v520
        %529 = vst [vmem:[%s261 + $0x38] sm:$0xff] %v521
        %s530 = sand.u32 %s121, 1
        %s531 = scalar_lea.sflag [#allocation4], %s530
        %s532 = sand.u32 %s121, 1
        %s533 = smul.addr %s532, 64
        %s534 = scalar_lea.vmem [#allocation8], %s533
        // Predicated region
        $region45: #{tpu_custom_call.1} parent=31 // pred_check
          %p535 = pneg %p131
        $region46: #{tpu_custom_call.1} parent=31 // pred_check_branch
          %537 = sbr.rel (%p535) target = $region48
        $region47: #{tpu_custom_call.1} parent=31 // pred_region
          %s538 = smul.u32 8, %s25
          %s540 = ssub.s32 1024, 1024
          %541 = vsyncadd %s531, %s540
          %s542 = smul.addr %s538, 2
          %s543 = sadd.s32 %s26, %s542
          %s544 = smul.addr %s543, 128
          %s545 = scalar_lea.hbm %s3, %s544
          %s546 = sshll.u32 %s534, 4
          %s547 = int_to_ptr.vmem [resolvable:$true] %s546
          %552 = dma.vmem_to_hbm [thread:$0]  %s547, 1024, %s545, %s531, 128, 256, 8
        $region48: #{tpu_custom_call.1} parent=31 // pred_fallthru
          _
      $region32: #{tpu_custom_call.1} parent=5 // pred_fallthru
        _
      %p553 = scmp.le.s32.totalorder 2, %s16
      // Predicated region
      $region49: #{tpu_custom_call.1} parent=5 // pred_check
        %p554 = pneg %p553
      $region50: #{tpu_custom_call.1} parent=5 // pred_check_branch
        %556 = sbr.rel (%p554) target = $region52
      $region51: #{tpu_custom_call.1} parent=5 // pred_region
        %s557 = ssub.s32 %s16, 2
        // Predicated region
        $region53: #{tpu_custom_call.1} parent=51 // pred_check
          %p558 = pneg %p137
        $region54: #{tpu_custom_call.1} parent=51 // pred_check_branch
          %560 = sbr.rel (%p558) target = $region56
        $region55: #{tpu_custom_call.1} parent=51 // pred_region
          %s561 = sand.u32 %s122, 1
          %s562 = scalar_lea.sflag [#allocation4], %s561
          %s563 = sand.u32 %s122, 1
          %s564 = smul.addr %s563, 64
          %s565 = scalar_lea.vmem [#allocation8], %s564
          %566 = dma.done %s562, 1024
        $region56: #{tpu_custom_call.1} parent=51 // pred_fallthru
          _
      $region52: #{tpu_custom_call.1} parent=5 // pred_fallthru
        _
    $region6: #{tpu_custom_call.1} parent=1 // loop_footer
      %s20 = sadd.s32 1, %s16
    $region7: #{tpu_custom_call.1} parent=1 // loop_footer_branch
      %15 = sbr.rel target = $region3
    $region8: #{tpu_custom_call.1} parent=1 // loop_exit
      _
    %567 = vsyncpa [#allocation3], 1
    %s568 = scalar_lea.sflag [#allocation3], 1
    %569 = vsyncpa %s568, 1
    %570 = vsyncpa [#allocation6], 1
    %s571 = scalar_lea.sflag [#allocation6], 1
    %572 = vsyncpa %s571, 1
    %573 = vsyncpa [#allocation4], 1
    %s574 = scalar_lea.sflag [#allocation4], 1
    %575 = vsyncpa %s574, 1

</llo_original>
